<compile_context>
chip_gen: v5e
topology: v5e:2x2
jax: 0.10.0
libtpu: 0.0.40
codegen_flags: <defaults>
</compile_context>

<pallas_src>
import numpy as np
import jax
import jax.numpy as jnp
from jax import lax
from jax.experimental import pallas as pl
from jax.experimental.pallas import tpu as pltpu


# ---------------------------------------------------------------------------
# Helpers
# ---------------------------------------------------------------------------
def _round_up(v, m):
    return ((v + m - 1) // m) * m


def _padded_plane_bytes(sub, lane, itemsize):
    """Bytes of a (sub, lane) plane once tiled to (8, 128) in VMEM."""
    return _round_up(max(sub, 1), 8) * _round_up(max(lane, 1), 128) * itemsize


def _vmem_capacity_bytes():
    try:
        return int(pltpu.get_tpu_info().vmem_capacity_bytes)
    except Exception:
        return 64 << 20  # v7x-safe fallback


def _compute_dtype_and_precision(dtype):
    # bf16: native single-pass MXU matmul against a bf16 one-hot is exact.
    # f32 (and anything promoted to f32): HIGHEST keeps the one-hot gather exact.
    if dtype == jnp.bfloat16:
        return jnp.bfloat16, lax.Precision.DEFAULT
    return jnp.float32, lax.Precision.HIGHEST


def _pick_channel_block(C, N, per_channel_bytes, fixed_bytes, budget_bytes):
    """Largest divisor of C whose double-buffered blocks fit the VMEM budget.
    When N == 1, keep Cb <= C//2 so the parallel grid has >= 2 steps (v7x)."""
    cap = C if N > 1 else max(1, C // 2)
    best = 1
    for cb in range(1, cap + 1):
        if C % cb != 0:
            continue
        if fixed_bytes + cb * per_channel_bytes <= budget_bytes:
            best = cb
    return best


def _lane_split_selectors(f, W, dtype):
    """sel[j, w, wf] = 1 iff w == wf*f + j   (de-interleave lanes)."""
    Wf = W // f
    w = np.arange(W)[:, None]
    v = np.arange(Wf)[None, :]
    sel = np.stack([(w == v * f + j) for j in range(f)]).astype(np.float32)
    return jnp.asarray(sel, dtype=dtype)


def _lane_merge_selectors(f, W, dtype):
    """sel[j, w, wo] = 1 iff wo == w*f + j   (interleave lanes)."""
    Wout = W * f
    w = np.arange(W)[:, None]
    wo = np.arange(Wout)[None, :]
    sel = np.stack([(wo == w * f + j) for j in range(f)]).astype(np.float32)
    return jnp.asarray(sel, dtype=dtype)


# ---------------------------------------------------------------------------
# Kernels
# ---------------------------------------------------------------------------
def _make_squeeze_kernel(f, Cb, Hf, W, compute_dtype, precision):
    Wf = W // f

    def kernel(sel_ref, x_ref, o_ref):
        # sel_ref: (f, W, Wf)          constant one-hot selectors (fetched once)
        # x_ref:   (1, Cb, Hf, f*W)    phase-i rows live in lane window [i*W, (i+1)*W)
        # o_ref:   (1, Cb, f, f, Hf, Wf)
        for i in range(f):
            xi = x_ref[0, :, :, pl.ds(i * W, W)]                   # (Cb, Hf, W)
            xi2 = xi.reshape(Cb * Hf, W).astype(compute_dtype)
            for j in range(f):
                z = jnp.dot(xi2, sel_ref[j],
                            preferred_element_type=jnp.float32,
                            precision=precision)                    # (Cb*Hf, Wf)
                o_ref[0, :, i, j, :, :] = z.reshape(Cb, Hf, Wf).astype(o_ref.dtype)

    return kernel


def _make_unsqueeze_kernel(f, Cb, H, W, compute_dtype, precision):
    # H, W are the *small* spatial dims of the squeezed input.
    Wout = W * f

    def kernel(sel_ref, x_ref, o_ref):
        # sel_ref: (f, W, Wout)
        # x_ref:   (1, Cb, f, f, H, W)
        # o_ref:   (1, Cb, H, f*Wout)  row (h*f+i) lives in lane window [i*Wout, (i+1)*Wout)
        for i in range(f):
            acc = jnp.zeros((Cb * H, Wout), jnp.float32)
            for j in range(f):
                xij = x_ref[0, :, i, j, :, :].reshape(Cb * H, W).astype(compute_dtype)
                acc = acc + jnp.dot(xij, sel_ref[j],
                                    preferred_element_type=jnp.float32,
                                    precision=precision)            # (Cb*H, Wout)
            o_ref[0, :, :, pl.ds(i * Wout, Wout)] = (
                acc.reshape(Cb, H, Wout).astype(o_ref.dtype))

    return kernel


# ---------------------------------------------------------------------------
# Wrappers
# ---------------------------------------------------------------------------
def squeeze_pallas(x, factor=2):
    assert factor >= 1
    if factor == 1:
        return x
    f = factor
    N, C, H, W = x.shape
    assert H % f == 0 and W % f == 0
    Hf, Wf = H // f, W // f
    itemsize = x.dtype.itemsize

    compute_dtype, precision = _compute_dtype_and_precision(x.dtype)
    sel = _lane_split_selectors(f, W, compute_dtype)

    vmem_cap = _vmem_capacity_bytes()
    sel_bytes = f * _padded_plane_bytes(W, Wf, jnp.dtype(compute_dtype).itemsize)
    in_pc = _padded_plane_bytes(Hf, f * W, itemsize)            # per channel, one buffer
    out_pc = f * f * _padded_plane_bytes(Hf, Wf, itemsize)
    per_c = 2 * (in_pc + out_pc)                                # double-buffered
    budget = int(0.35 * vmem_cap)
    Cb = _pick_channel_block(C, N, per_c, sel_bytes + (2 << 20), budget)

    kernel = _make_squeeze_kernel(f, Cb, Hf, W, compute_dtype, precision)
    x4 = x.reshape(N, C, Hf, f * W)       # free reshape (same memory order)

    out6 = pl.pallas_call(
        kernel,
        out_shape=jax.ShapeDtypeStruct((N, C, f, f, Hf, Wf), x.dtype),
        grid=(N, C // Cb),
        in_specs=[
            pl.BlockSpec((f, W, Wf), lambda n, c: (0, 0, 0)),
            pl.BlockSpec((1, Cb, Hf, f * W), lambda n, c: (n, c, 0, 0)),
        ],
        out_specs=pl.BlockSpec((1, Cb, f, f, Hf, Wf),
                               lambda n, c: (n, c, 0, 0, 0, 0)),
        compiler_params=pltpu.CompilerParams(
            dimension_semantics=("parallel", "parallel"),
            vmem_limit_bytes=int(0.8 * vmem_cap)),
        cost_estimate=pl.CostEstimate(flops=2 * x.size * W, transcendentals=0,
                                      bytes_accessed=2 * x.size * itemsize),
    )(sel, x4)
    # Free reshape (same memory order): (N,C,f,f,Hf,Wf) -> (N,C*f*f,Hf,Wf)
    return out6.reshape(N, C * f * f, Hf, Wf)


def unsqueeze_pallas(x, factor=2):
    assert factor >= 1
    if factor == 1:
        return x
    f = factor
    N, nc, H, W = x.shape
    assert nc >= f * f and nc % (f * f) == 0
    C = nc // (f * f)
    Hout, Wout = H * f, W * f
    itemsize = x.dtype.itemsize

    compute_dtype, precision = _compute_dtype_and_precision(x.dtype)
    sel = _lane_merge_selectors(f, W, compute_dtype)

    vmem_cap = _vmem_capacity_bytes()
    sel_bytes = f * _padded_plane_bytes(W, Wout, jnp.dtype(compute_dtype).itemsize)
    in_pc = f * f * _padded_plane_bytes(H, W, itemsize)
    out_pc = _padded_plane_bytes(H, f * Wout, itemsize)
    per_c = 2 * (in_pc + out_pc)
    budget = int(0.35 * vmem_cap)
    Cb = _pick_channel_block(C, N, per_c, sel_bytes + (2 << 20), budget)

    kernel = _make_unsqueeze_kernel(f, Cb, H, W, compute_dtype, precision)
    x6 = x.reshape(N, C, f, f, H, W)      # free reshape

    out4 = pl.pallas_call(
        kernel,
        out_shape=jax.ShapeDtypeStruct((N, C, H, f * Wout), x.dtype),
        grid=(N, C // Cb),
        in_specs=[
            pl.BlockSpec((f, W, Wout), lambda n, c: (0, 0, 0)),
            pl.BlockSpec((1, Cb, f, f, H, W), lambda n, c: (n, c, 0, 0, 0, 0)),
        ],
        out_specs=pl.BlockSpec((1, Cb, H, f * Wout), lambda n, c: (n, c, 0, 0)),
        compiler_params=pltpu.CompilerParams(
            dimension_semantics=("parallel", "parallel"),
            vmem_limit_bytes=int(0.8 * vmem_cap)),
        cost_estimate=pl.CostEstimate(flops=2 * x.size * W, transcendentals=0,
                                      bytes_accessed=2 * x.size * itemsize),
    )(sel, x6)
    # Free reshape: (N, C, H, f*Wout) -> (N, C, Hout, Wout)
    return out4.reshape(N, C, Hout, Wout)


class Squeeze2d:
    """JAX/Pallas port of the PyTorch Squeeze2d module (no parameters)."""

    def __init__(self, factor=2):
        self.factor = factor

    def forward(self, x, logdet=None, reverse=False):
        if not reverse:
            output = squeeze_pallas(x, self.factor)
        else:
            output = unsqueeze_pallas(x, self.factor)
        return (output, logdet)

    __call__ = forward


# ---------------------------------------------------------------------------
# Pure-JAX references (for verification only)
# ---------------------------------------------------------------------------
def squeeze_ref(x, f):
    N, C, H, W = x.shape
    x = x.reshape(N, C, H // f, f, W // f, f)
    x = jnp.transpose(x, (0, 1, 3, 5, 2, 4))
    return x.reshape(N, C * f * f, H // f, W // f)


def unsqueeze_ref(x, f):
    N, C, H, W = x.shape
    x = x.reshape(N, C // (f * f), f, f, H, W)
    x = jnp.transpose(x, (0, 1, 4, 2, 5, 3))
    return x.reshape(N, C // (f * f), H * f, W * f)


if __name__ == "__main__":
    key = jax.random.PRNGKey(0)
    x = jax.random.normal(key, (2, 4, 16, 16), dtype=jnp.float32)

    mod = Squeeze2d(factor=2)

    # forward (squeeze)
    out, logdet = mod.forward(x, logdet=None, reverse=False)
    out = jax.block_until_ready(out)
    assert out.shape == (2, 16, 8, 8)
    assert logdet is None
    np.testing.assert_allclose(np.asarray(out),
                               np.asarray(squeeze_ref(x, 2)),
                               rtol=1e-5, atol=1e-5)

    # reverse (unsqueeze) — round trip back to the input
    back, _ = mod.forward(out, logdet=None, reverse=True)
    back = jax.block_until_ready(back)
    assert back.shape == x.shape
    np.testing.assert_allclose(np.asarray(back), np.asarray(x),
                               rtol=1e-5, atol=1e-5)
    np.testing.assert_allclose(np.asarray(back),
                               np.asarray(unsqueeze_ref(out, 2)),
                               rtol=1e-5, atol=1e-5)

    print("KERNEL_OK")
</pallas_src>

<mosaic_0001>
module attributes {stable_mosaic.version = 11 : i64} {
  func.func @kernel(%arg0: i32, %arg1: i32, %arg2: memref<2x16x8xf32, #tpu.memory_space<vmem>>, %arg3: memref<1x4x8x32xf32, #tpu.memory_space<vmem>>, %arg4: memref<1x4x2x2x8x8xf32, #tpu.memory_space<vmem>>) attributes {dimension_semantics = [#tpu.dimension_semantics<parallel>, #tpu.dimension_semantics<parallel>], iteration_bounds = array<i64: 2, 1>, scalar_prefetch = 0 : i64, scratch_operands = 0 : i64, tpu.core_type = #tpu.core_type<tc>, window_params = [{pipeline_mode = #tpu.pipeline_mode<synchronous>, transform_indices = @transform_0, window_bounds = array<i64: 2, 16, 8>}, {transform_indices = @transform_1, window_bounds = array<i64: 1, 4, 8, 32>}, {transform_indices = @transform_2, window_bounds = array<i64: 1, 4, 2, 2, 8, 8>}]} {
    %c0 = arith.constant 0 : index
    %c0_0 = arith.constant 0 : index
    %c0_1 = arith.constant 0 : index
    %c0_2 = arith.constant 0 : index
    %0 = vector.load %arg3[%c0, %c0_0, %c0_1, %c0_2] : memref<1x4x8x32xf32, #tpu.memory_space<vmem>>, vector<1x4x8x16xf32>
    %1 = vector.shape_cast %0 : vector<1x4x8x16xf32> to vector<4x8x16xf32>
    %2 = vector.shape_cast %1 : vector<4x8x16xf32> to vector<32x16xf32>
    %c0_3 = arith.constant 0 : index
    %c0_4 = arith.constant 0 : index
    %c0_5 = arith.constant 0 : index
    %3 = vector.load %arg2[%c0_3, %c0_4, %c0_5] : memref<2x16x8xf32, #tpu.memory_space<vmem>>, vector<1x16x8xf32>
    %4 = vector.shape_cast %3 : vector<1x16x8xf32> to vector<16x8xf32>
    %cst = arith.constant dense<0.000000e+00> : vector<32x8xf32>
    %5 = tpu.matmul %2, %4, %cst {dimension_numbers = #tpu.dot_dimension_numbers<[1], [0], [0], [1], [0, 0, 1, 1], [], []>, precision = #tpu.contract_precision<fp32>} : vector<32x16xf32>, vector<16x8xf32>, vector<32x8xf32> -> vector<32x8xf32>
    %6 = vector.shape_cast %5 : vector<32x8xf32> to vector<4x8x8xf32>
    %c0_6 = arith.constant 0 : index
    %c0_7 = arith.constant 0 : index
    %c0_8 = arith.constant 0 : index
    %c0_9 = arith.constant 0 : index
    %c0_10 = arith.constant 0 : index
    %c0_11 = arith.constant 0 : index
    %7 = vector.load %arg4[%c0_6, %c0_7, %c0_8, %c0_9, %c0_10, %c0_11] : memref<1x4x2x2x8x8xf32, #tpu.memory_space<vmem>>, vector<1x4x1x1x8x8xf32>
    %8 = vector.shape_cast %7 : vector<1x4x1x1x8x8xf32> to vector<4x8x8xf32>
    %9 = vector.shape_cast %6 : vector<4x8x8xf32> to vector<1x4x1x1x8x8xf32>
    tpu.vector_store %arg4[%c0_6, %c0_7, %c0_8, %c0_9, %c0_10, %c0_11], %9 {strides = array<i32>} : memref<1x4x2x2x8x8xf32, #tpu.memory_space<vmem>>, vector<1x4x1x1x8x8xf32>,
    %c1 = arith.constant 1 : index
    %c0_12 = arith.constant 0 : index
    %c0_13 = arith.constant 0 : index
    %10 = vector.load %arg2[%c1, %c0_12, %c0_13] : memref<2x16x8xf32, #tpu.memory_space<vmem>>, vector<1x16x8xf32>
    %11 = vector.shape_cast %10 : vector<1x16x8xf32> to vector<16x8xf32>
    %cst_14 = arith.constant dense<0.000000e+00> : vector<32x8xf32>
    %12 = tpu.matmul %2, %11, %cst_14 {dimension_numbers = #tpu.dot_dimension_numbers<[1], [0], [0], [1], [0, 0, 1, 1], [], []>, precision = #tpu.contract_precision<fp32>} : vector<32x16xf32>, vector<16x8xf32>, vector<32x8xf32> -> vector<32x8xf32>
    %13 = vector.shape_cast %12 : vector<32x8xf32> to vector<4x8x8xf32>
    %c0_15 = arith.constant 0 : index
    %c0_16 = arith.constant 0 : index
    %c0_17 = arith.constant 0 : index
    %c1_18 = arith.constant 1 : index
    %c0_19 = arith.constant 0 : index
    %c0_20 = arith.constant 0 : index
    %14 = vector.load %arg4[%c0_15, %c0_16, %c0_17, %c1_18, %c0_19, %c0_20] : memref<1x4x2x2x8x8xf32, #tpu.memory_space<vmem>>, vector<1x4x1x1x8x8xf32>
    %15 = vector.shape_cast %14 : vector<1x4x1x1x8x8xf32> to vector<4x8x8xf32>
    %16 = vector.shape_cast %13 : vector<4x8x8xf32> to vector<1x4x1x1x8x8xf32>
    tpu.vector_store %arg4[%c0_15, %c0_16, %c0_17, %c1_18, %c0_19, %c0_20], %16 {strides = array<i32>} : memref<1x4x2x2x8x8xf32, #tpu.memory_space<vmem>>, vector<1x4x1x1x8x8xf32>,
    %c0_21 = arith.constant 0 : index
    %c0_22 = arith.constant 0 : index
    %c0_23 = arith.constant 0 : index
    %c16 = arith.constant 16 : index
    %17 = vector.load %arg3[%c0_21, %c0_22, %c0_23, %c16] : memref<1x4x8x32xf32, #tpu.memory_space<vmem>>, vector<1x4x8x16xf32>
    %18 = vector.shape_cast %17 : vector<1x4x8x16xf32> to vector<4x8x16xf32>
    %19 = vector.shape_cast %18 : vector<4x8x16xf32> to vector<32x16xf32>
    %c0_24 = arith.constant 0 : index
    %c0_25 = arith.constant 0 : index
    %c0_26 = arith.constant 0 : index
    %20 = vector.load %arg2[%c0_24, %c0_25, %c0_26] : memref<2x16x8xf32, #tpu.memory_space<vmem>>, vector<1x16x8xf32>
    %21 = vector.shape_cast %20 : vector<1x16x8xf32> to vector<16x8xf32>
    %cst_27 = arith.constant dense<0.000000e+00> : vector<32x8xf32>
    %22 = tpu.matmul %19, %21, %cst_27 {dimension_numbers = #tpu.dot_dimension_numbers<[1], [0], [0], [1], [0, 0, 1, 1], [], []>, precision = #tpu.contract_precision<fp32>} : vector<32x16xf32>, vector<16x8xf32>, vector<32x8xf32> -> vector<32x8xf32>
    %23 = vector.shape_cast %22 : vector<32x8xf32> to vector<4x8x8xf32>
    %c0_28 = arith.constant 0 : index
    %c0_29 = arith.constant 0 : index
    %c1_30 = arith.constant 1 : index
    %c0_31 = arith.constant 0 : index
    %c0_32 = arith.constant 0 : index
    %c0_33 = arith.constant 0 : index
    %24 = vector.load %arg4[%c0_28, %c0_29, %c1_30, %c0_31, %c0_32, %c0_33] : memref<1x4x2x2x8x8xf32, #tpu.memory_space<vmem>>, vector<1x4x1x1x8x8xf32>
    %25 = vector.shape_cast %24 : vector<1x4x1x1x8x8xf32> to vector<4x8x8xf32>
    %26 = vector.shape_cast %23 : vector<4x8x8xf32> to vector<1x4x1x1x8x8xf32>
    tpu.vector_store %arg4[%c0_28, %c0_29, %c1_30, %c0_31, %c0_32, %c0_33], %26 {strides = array<i32>} : memref<1x4x2x2x8x8xf32, #tpu.memory_space<vmem>>, vector<1x4x1x1x8x8xf32>,
    %c1_34 = arith.constant 1 : index
    %c0_35 = arith.constant 0 : index
    %c0_36 = arith.constant 0 : index
    %27 = vector.load %arg2[%c1_34, %c0_35, %c0_36] : memref<2x16x8xf32, #tpu.memory_space<vmem>>, vector<1x16x8xf32>
    %28 = vector.shape_cast %27 : vector<1x16x8xf32> to vector<16x8xf32>
    %cst_37 = arith.constant dense<0.000000e+00> : vector<32x8xf32>
    %29 = tpu.matmul %19, %28, %cst_37 {dimension_numbers = #tpu.dot_dimension_numbers<[1], [0], [0], [1], [0, 0, 1, 1], [], []>, precision = #tpu.contract_precision<fp32>} : vector<32x16xf32>, vector<16x8xf32>, vector<32x8xf32> -> vector<32x8xf32>
    %30 = vector.shape_cast %29 : vector<32x8xf32> to vector<4x8x8xf32>
    %c0_38 = arith.constant 0 : index
    %c0_39 = arith.constant 0 : index
    %c1_40 = arith.constant 1 : index
    %c1_41 = arith.constant 1 : index
    %c0_42 = arith.constant 0 : index
    %c0_43 = arith.constant 0 : index
    %31 = vector.load %arg4[%c0_38, %c0_39, %c1_40, %c1_41, %c0_42, %c0_43] : memref<1x4x2x2x8x8xf32, #tpu.memory_space<vmem>>, vector<1x4x1x1x8x8xf32>
    %32 = vector.shape_cast %31 : vector<1x4x1x1x8x8xf32> to vector<4x8x8xf32>
    %33 = vector.shape_cast %30 : vector<4x8x8xf32> to vector<1x4x1x1x8x8xf32>
    tpu.vector_store %arg4[%c0_38, %c0_39, %c1_40, %c1_41, %c0_42, %c0_43], %33 {strides = array<i32>} : memref<1x4x2x2x8x8xf32, #tpu.memory_space<vmem>>, vector<1x4x1x1x8x8xf32>,
    return
  }
  func.func @transform_0(%arg0: i32, %arg1: i32) -> (i32, i32, i32) {
    %c0_i32 = arith.constant 0 : i32
    %c0_i32_0 = arith.constant 0 : i32
    %c0_i32_1 = arith.constant 0 : i32
    %c0_i32_2 = arith.constant 0 : i32
    return %c0_i32, %c0_i32_0, %c0_i32_1 : i32, i32, i32
  }
  func.func @transform_1(%arg0: i32, %arg1: i32) -> (i32, i32, i32, i32) {
    %c0_i32 = arith.constant 0 : i32
    %c0_i32_0 = arith.constant 0 : i32
    %c0_i32_1 = arith.constant 0 : i32
    return %arg0, %arg1, %c0_i32, %c0_i32_0 : i32, i32, i32, i32
  }
  func.func @transform_2(%arg0: i32, %arg1: i32) -> (i32, i32, i32, i32, i32, i32) {
    %c0_i32 = arith.constant 0 : i32
    %c0_i32_0 = arith.constant 0 : i32
    %c0_i32_1 = arith.constant 0 : i32
    %c0_i32_2 = arith.constant 0 : i32
    %c0_i32_3 = arith.constant 0 : i32
    return %arg0, %arg1, %c0_i32, %c0_i32_0, %c0_i32_1, %c0_i32_2 : i32, i32, i32, i32, i32, i32
  }
}

</mosaic_0001>

<llo_original>
// kernel: tpu_custom_call.1
$region0: #{tpu_custom_call.1}
  #allocation0 [shape = 'u32[]', space=smem, size = 0x4, offset = 0x4, fixed_abs, tag = 'smem constant byte address 0x4 - core index']
  #allocation1 [shape = 'u32[72,128]{1,0:T(1,128)}', space=vmem, size = 0x9000, scoped, tag = 'internal scratch']
  %s0 = inlined_call_operand.vmem [shape: f32[2,16,8], index: 0, kind: input, shape index: {}]
  %s1 = inlined_call_operand.hbm [shape: f32[2,4,8,32], index: 1, kind: input, shape index: {}]
  %s2 = inlined_call_operand.hbm [shape: f32[2,4,2,2,8,8], index: 2, kind: output, shape index: {}]
  %s3 = sld [smem:[#allocation0]]
  $region45: #{tpu_custom_call.1} parent=0
    _
  %s5 = ssub.s32 1, %s3
  %s6 = scalar_select 0, %s5, %s3
  $region1: #{tpu_custom_call.1} parent=0
    #allocation2 [shape = 'u8[32768]{0}', space=vmem, size = 0x8000, scoped, tag = 'input window, operand 1']
    #allocation3 [shape = 's32[2]{0}', space=sflag, size = 0x8, scoped, tag = 'scoped memory for tpu_custom_call.1']
    #allocation4 [shape = 's32[2]{0}', space=sflag, size = 0x8, scoped, tag = 'scoped memory for tpu_custom_call.1']
    #allocation5 [shape = 'u8[131072]{0}', space=vmem, size = 0x20000, scoped, tag = 'output window, operand 0']
    %7 = vsyncpa [#allocation3], 0
    %s8 = scalar_lea.sflag [#allocation3], 1
    %9 = vsyncpa %s8, 0
    %10 = vsyncpa [#allocation4], 0
    %s11 = scalar_lea.sflag [#allocation4], 1
    %12 = vsyncpa %s11, 0
    loop: start=0, step=1, limit=4
    $region2: #{tpu_custom_call.1} parent=1 // loop_pre_header
      _
    $region3: #{tpu_custom_call.1} parent=1 // loop_header
      %s14 = sphi 0, %s18
      %p15 = scmp.ge.s32.totalorder %s14, 4
      %s21 = sphi 0, %s33
      %s22 = sphi 0, %s29
      %s23 = sphi 0, %s21
      %s24 = sphi 0, %s22
      %s25 = sphi 0, %s23
      %s26 = sphi 0, %s24
      %s34 = sphi 0, %s34
      %s36 = sphi 0, %s34
      %s37 = sphi 0, %s36
      %s51 = sphi 0, %s37
      %s59 = sphi 0, %s61
      %s62 = sphi 0, %s59
      %s63 = sphi 0, %s62
      %s79 = sphi 0, %s63
      %s87 = sphi 0, %s89
      %s90 = sphi 0, %s87
      %s91 = sphi 0, %s90
      %s107 = sphi 0, %s91
    $region4: #{tpu_custom_call.1} parent=1 // loop_header_branch
      %17 = sbr.rel (%p15) target = $region8
    $region5: #{tpu_custom_call.1} parent=1 // loop_body
      %s19 = ssub.s32 %s14, 1
      %s20 = ssub.s32 %s14, 2
      %s27 = sadd.s32 1, %s22
      %p28 = scmp.ge.s32.totalorder %s27, 1
      %s29 = scalar_select %p28, 0, %s27
      %s30 = sadd.s32 1, %s21
      %s31 = scalar_select %p28, %s30, %s21
      %p32 = scmp.ge.s32.totalorder %s31, 2
      %s33 = scalar_select %p32, 0, %s31
      %s35 = sadd.s32 %s34, 1
      %p38 = scmp.eq.s32.totalorder %s14, 1
      %p39 = scmp.ne.s32.totalorder %s34, %s36
      %p40 = scmp.eq.s32.totalorder %s14, 0
      %p41 = por %p39, %p40
      %p42 = scmp.ne.s32.totalorder %s34, %s36
      %p43 = scmp.eq.s32.totalorder %s19, 1
      %p44 = por %p42, %p43
      %p45 = scmp.ne.s32.totalorder %s36, %s37
      %p46 = scmp.eq.s32.totalorder %s19, 0
      %p47 = por %p45, %p46
      %p48 = scmp.ne.s32.totalorder %s36, %s37
      %p49 = scmp.eq.s32.totalorder %s20, 1
      %p50 = por %p48, %p49
      %p52 = scmp.ne.s32.totalorder %s37, %s51
      %p53 = scmp.eq.s32.totalorder %s20, 0
      %p54 = por %p52, %p53
      %s55 = ssub.s32 %s21, %s33
      %s56 = ssub.s32 %s22, %s29
      %s57 = sor.u32 %s55, %s56
      %p58 = scmp.eq.s32.totalorder %s57, 0
      %s60 = sadd.s32 %s59, 1
      %s61 = scalar_select %p58, %s59, %s60
      %p64 = pneg %p58
      %p65 = scmp.eq.s32.totalorder %s14, 1
      %p66 = por %p64, %p65
      %p67 = scmp.ne.s32.totalorder %s59, %s62
      %p68 = scmp.eq.s32.totalorder %s14, 0
      %p69 = por %p67, %p68
      %p70 = scmp.ne.s32.totalorder %s59, %s62
      %p71 = scmp.eq.s32.totalorder %s19, 1
      %p72 = por %p70, %p71
      %p73 = scmp.ne.s32.totalorder %s62, %s63
      %p74 = scmp.eq.s32.totalorder %s19, 0
      %p75 = por %p73, %p74
      %p76 = scmp.ne.s32.totalorder %s62, %s63
      %p77 = scmp.eq.s32.totalorder %s20, 1
      %p78 = por %p76, %p77
      %p80 = scmp.ne.s32.totalorder %s63, %s79
      %p81 = scmp.eq.s32.totalorder %s20, 0
      %p82 = por %p80, %p81
      %s83 = ssub.s32 %s21, %s33
      %s84 = ssub.s32 %s22, %s29
      %s85 = sor.u32 %s83, %s84
      %p86 = scmp.eq.s32.totalorder %s85, 0
      %s88 = sadd.s32 %s87, 1
      %s89 = scalar_select %p86, %s87, %s88
      %p92 = pneg %p86
      %p93 = scmp.eq.s32.totalorder %s14, 1
      %p94 = por %p92, %p93
      %p95 = scmp.ne.s32.totalorder %s87, %s90
      %p96 = scmp.eq.s32.totalorder %s14, 0
      %p97 = por %p95, %p96
      %p98 = scmp.ne.s32.totalorder %s87, %s90
      %p99 = scmp.eq.s32.totalorder %s19, 1
      %p100 = por %p98, %p99
      %p101 = scmp.ne.s32.totalorder %s90, %s91
      %p102 = scmp.eq.s32.totalorder %s19, 0
      %p103 = por %p101, %p102
      %p104 = scmp.ne.s32.totalorder %s90, %s91
      %p105 = scmp.eq.s32.totalorder %s20, 1
      %p106 = por %p104, %p105
      %p108 = scmp.ne.s32.totalorder %s91, %s107
      %p109 = scmp.eq.s32.totalorder %s20, 0
      %p110 = por %p108, %p109
      %p111 = scmp.le.s32.totalorder 1, %s14
      %p112 = scmp.lt.s32.totalorder %s14, 3
      %p113 = pnand %p111, %p112
      %p114 = pneg %p113
      // Predicated region
      $region9: #{tpu_custom_call.1} parent=5 // pred_check
        _
      $region10: #{tpu_custom_call.1} parent=5 // pred_check_branch
        %116 = sbr.rel (%p113) target = $region12
      $region11: #{tpu_custom_call.1} parent=5 // pred_region
        %s117 = ssub.s32 %s14, 1
        // Predicated region
        $region13: #{tpu_custom_call.1} parent=11 // pred_check
          %p118 = pneg %p47
        $region14: #{tpu_custom_call.1} parent=11 // pred_check_branch
          %120 = sbr.rel (%p118) target = $region16
        $region15: #{tpu_custom_call.1} parent=11 // pred_region
          _
        $region16: #{tpu_custom_call.1} parent=11 // pred_fallthru
          _
      $region12: #{tpu_custom_call.1} parent=5 // pred_fallthru
        _
      %p121 = scmp.lt.s32.totalorder %s14, 2
      // Predicated region
      $region17: #{tpu_custom_call.1} parent=5 // pred_check
        %p122 = pneg %p121
      $region18: #{tpu_custom_call.1} parent=5 // pred_check_branch
        %124 = sbr.rel (%p122) target = $region20
      $region19: #{tpu_custom_call.1} parent=5 // pred_region
        // Predicated region
        $region21: #{tpu_custom_call.1} parent=19 // pred_check
          %p125 = pneg %p69
        $region22: #{tpu_custom_call.1} parent=19 // pred_check_branch
          %127 = sbr.rel (%p125) target = $region24
        $region23: #{tpu_custom_call.1} parent=19 // pred_region
          %s128 = sand.u32 %s59, 1
          %s129 = scalar_lea.sflag [#allocation3], %s128
          %s130 = sand.u32 %s59, 1
          %s131 = smul.addr %s130, 32
          %s132 = scalar_lea.vmem [#allocation2], %s131
          %s133 = smul.u32 4, %s22
          %135 = vsyncadd %s129, 0
          %s136 = smul.addr %s21, 4
          %s137 = sadd.s32 %s133, %s136
          %s138 = smul.addr %s137, 8
          %s139 = scalar_lea.hbm %s1, %s138
          %s140 = sshll.u32 %s139, 4
          %s141 = int_to_ptr.hbm [resolvable:$true] %s140
          %s142 = sshll.u32 %s132, 4
          %s143 = int_to_ptr.vmem [resolvable:$true] %s142
          %148 = dma.hbm_to_vmem [thread:$0]  %s141, 512, %s143, %s129, 128, 128, 8
        $region24: #{tpu_custom_call.1} parent=19 // pred_fallthru
          _
      $region20: #{tpu_custom_call.1} parent=5 // pred_fallthru
        _
      %p149 = scmp.le.s32.totalorder 1, %s14
      %p150 = scmp.lt.s32.totalorder %s14, 3
      %p151 = pnand %p149, %p150
      %p152 = pneg %p151
      // Predicated region
      $region25: #{tpu_custom_call.1} parent=5 // pred_check
        _
      $region26: #{tpu_custom_call.1} parent=5 // pred_check_branch
        %154 = sbr.rel (%p151) target = $region28
      $region27: #{tpu_custom_call.1} parent=5 // pred_region
        %s155 = ssub.s32 %s14, 1
        %s156 = sand.u32 %s62, 1
        %s157 = scalar_lea.sflag [#allocation3], %s156
        %s158 = sand.u32 %s62, 1
        %s159 = smul.addr %s158, 32
        %s160 = scalar_lea.vmem [#allocation2], %s159
        // Predicated region
        $region29: #{tpu_custom_call.1} parent=27 // pred_check
          %p161 = pneg %p75
        $region30: #{tpu_custom_call.1} parent=27 // pred_check_branch
          %163 = sbr.rel (%p161) target = $region32
        $region31: #{tpu_custom_call.1} parent=27 // pred_region
          %165 = dma.done %s157, 512
        $region32: #{tpu_custom_call.1} parent=27 // pred_fallthru
          _
        %p166 = pneg %p47
        %p167 = pneg %p44
        %s168 = sand.u32 %s62, 1
        %s169 = scalar_lea.sflag [#allocation3], %s168
        %s170 = sand.u32 %s62, 1
        %s171 = smul.addr %s170, 32
        %s172 = scalar_lea.vmem [#allocation2], %s171
        %p173 = pneg %p75
        %p174 = pneg %p72
        %p175 = pneg %p103
        %p176 = pneg %p100
        %s177 = sand.u32 %s90, 1
        %s178 = scalar_lea.sflag [#allocation4], %s177
        %s179 = sand.u32 %s90, 1
        %s180 = smul.addr %s179, 128
        %s181 = scalar_lea.vmem [#allocation5], %s180
        %s182 = smul.u32 4, %s24
        %s183 = smul.u32 4, %s24
        %v184 = vld [vmem:[%s160] sm:$0xff]
        %v185 = vld [vmem:[%s160 + $0x8] sm:$0xff]
        %v186 = vld [vmem:[%s160 + $0x10] sm:$0xff]
        %v187 = vld [vmem:[%s160 + $0x18] sm:$0xff]
        %v188 = vld [vmem:[%s0] sm:$0xff]
        %v189 = vld [vmem:[%s0 + $0x8] sm:$0xff]
        %vm190 = vcmask 130048
        %v192 = vsel %vm190, %v184, 0
        %v195 = vsel %vm190, %v185, 0
        %v198 = vsel %vm190, %v186, 0
        %v201 = vsel %vm190, %v187, 0
        %203 = vmatpush.msra.mxu0 0.0
        %204 = vmatpush.msra.mxu0 0.0
        %205 = vmatpush.msra.mxu0 0.0
        %206 = vmatpush.msra.mxu0 0.0
        %207 = vmatpush.msra.mxu0 0.0
        %208 = vmatpush.msra.mxu0 0.0
        %209 = vmatpush.msra.mxu0 0.0
        %210 = vmatpush.msra.mxu0 0.0
        %211 = vmatpush.msra.mxu0 0.0
        %212 = vmatpush.msra.mxu0 0.0
        %213 = vmatpush.msra.mxu0 0.0
        %214 = vmatpush.msra.mxu0 0.0
        %215 = vmatpush.msra.mxu0 0.0
        %216 = vmatpush.msra.mxu0 0.0
        %v217 = vand.u32 %v189, 4294901760
        %218 = vmatpush.msra.mxu0 %v217
        %v219 = vand.u32 %v188, 4294901760
        %220 = vmatpush.msra.mxu0 %v219
        %v221 = vand.u32 %v192, 4294901760
        %v222 = vsub.f32 %v192, %v221
        %v223 = vand.u32 %v222, 4294901760
        %v224 = vsub.f32 %v222, %v223
        %v225 = vand.u32 %v224, 4294901760
        %226 = vmatmul.f32.gmra.mxu0 %v225
        %v227 = vpop.f32.mrf.mxu0
        %v228 = vadd.f32 0.0, %v227
        %v229 = vand.u32 %v195, 4294901760
        %v230 = vsub.f32 %v195, %v229
        %v231 = vand.u32 %v230, 4294901760
        %v232 = vsub.f32 %v230, %v231
        %v233 = vand.u32 %v232, 4294901760
        %234 = vmatmul.f32.gmra.mxu0 %v233
        %v235 = vpop.f32.mrf.mxu0
        %v236 = vadd.f32 0.0, %v235
        %v237 = vand.u32 %v198, 4294901760
        %v238 = vsub.f32 %v198, %v237
        %v239 = vand.u32 %v238, 4294901760
        %v240 = vsub.f32 %v238, %v239
        %v241 = vand.u32 %v240, 4294901760
        %242 = vmatmul.f32.gmra.mxu0 %v241
        %v243 = vpop.f32.mrf.mxu0
        %v244 = vadd.f32 0.0, %v243
        %v245 = vand.u32 %v201, 4294901760
        %v246 = vsub.f32 %v201, %v245
        %v247 = vand.u32 %v246, 4294901760
        %v248 = vsub.f32 %v246, %v247
        %v249 = vand.u32 %v248, 4294901760
        %250 = vmatmul.f32.gmra.mxu0 %v249
        %v251 = vpop.f32.mrf.mxu0
        %v252 = vadd.f32 0.0, %v251
        %253 = vdwg.mxu0
        %254 = vmatpush.msra.mxu0 0.0
        %255 = vmatpush.msra.mxu0 0.0
        %256 = vmatpush.msra.mxu0 0.0
        %257 = vmatpush.msra.mxu0 0.0
        %258 = vmatpush.msra.mxu0 0.0
        %259 = vmatpush.msra.mxu0 0.0
        %260 = vmatpush.msra.mxu0 0.0
        %261 = vmatpush.msra.mxu0 0.0
        %262 = vmatpush.msra.mxu0 0.0
        %263 = vmatpush.msra.mxu0 0.0
        %264 = vmatpush.msra.mxu0 0.0
        %265 = vmatpush.msra.mxu0 0.0
        %266 = vmatpush.msra.mxu0 0.0
        %267 = vmatpush.msra.mxu0 0.0
        %v268 = vand.u32 %v189, 4294901760
        %v269 = vsub.f32 %v189, %v268
        %v270 = vand.u32 %v269, 4294901760
        %v271 = vsub.f32 %v269, %v270
        %v272 = vand.u32 %v271, 4294901760
        %273 = vmatpush.msra.mxu0 %v272
        %v274 = vand.u32 %v188, 4294901760
        %v275 = vsub.f32 %v188, %v274
        %v276 = vand.u32 %v275, 4294901760
        %v277 = vsub.f32 %v275, %v276
        %v278 = vand.u32 %v277, 4294901760
        %279 = vmatpush.msra.mxu0 %v278
        %v280 = vand.u32 %v192, 4294901760
        %281 = vmatmul.f32.gmra.mxu0 %v280
        %v282 = vpop.f32.mrf.mxu0
        %v283 = vadd.f32 %v228, %v282
        %v284 = vand.u32 %v195, 4294901760
        %285 = vmatmul.f32.gmra.mxu0 %v284
        %v286 = vpop.f32.mrf.mxu0
        %v287 = vadd.f32 %v236, %v286
        %v288 = vand.u32 %v198, 4294901760
        %289 = vmatmul.f32.gmra.mxu0 %v288
        %v290 = vpop.f32.mrf.mxu0
        %v291 = vadd.f32 %v244, %v290
        %v292 = vand.u32 %v201, 4294901760
        %293 = vmatmul.f32.gmra.mxu0 %v292
        %v294 = vpop.f32.mrf.mxu0
        %v295 = vadd.f32 %v252, %v294
        %296 = vdwg.mxu0
        %297 = vmatpush.msra.mxu0 0.0
        %298 = vmatpush.msra.mxu0 0.0
        %299 = vmatpush.msra.mxu0 0.0
        %300 = vmatpush.msra.mxu0 0.0
        %301 = vmatpush.msra.mxu0 0.0
        %302 = vmatpush.msra.mxu0 0.0
        %303 = vmatpush.msra.mxu0 0.0
        %304 = vmatpush.msra.mxu0 0.0
        %305 = vmatpush.msra.mxu0 0.0
        %306 = vmatpush.msra.mxu0 0.0
        %307 = vmatpush.msra.mxu0 0.0
        %308 = vmatpush.msra.mxu0 0.0
        %309 = vmatpush.msra.mxu0 0.0
        %310 = vmatpush.msra.mxu0 0.0
        %v311 = vand.u32 %v189, 4294901760
        %v312 = vsub.f32 %v189, %v311
        %313 = vmatpush.msra.mxu0 %v312
        %v314 = vand.u32 %v188, 4294901760
        %v315 = vsub.f32 %v188, %v314
        %316 = vmatpush.msra.mxu0 %v315
        %v317 = vand.u32 %v192, 4294901760
        %v318 = vsub.f32 %v192, %v317
        %319 = vmatmul.f32.gmra.mxu0 %v318
        %v320 = vpop.f32.mrf.mxu0
        %v321 = vadd.f32 %v283, %v320
        %v322 = vand.u32 %v195, 4294901760
        %v323 = vsub.f32 %v195, %v322
        %324 = vmatmul.f32.gmra.mxu0 %v323
        %v325 = vpop.f32.mrf.mxu0
        %v326 = vadd.f32 %v287, %v325
        %v327 = vand.u32 %v198, 4294901760
        %v328 = vsub.f32 %v198, %v327
        %329 = vmatmul.f32.gmra.mxu0 %v328
        %v330 = vpop.f32.mrf.mxu0
        %v331 = vadd.f32 %v291, %v330
        %v332 = vand.u32 %v201, 4294901760
        %v333 = vsub.f32 %v201, %v332
        %334 = vmatmul.f32.gmra.mxu0 %v333
        %v335 = vpop.f32.mrf.mxu0
        %v336 = vadd.f32 %v295, %v335
        %337 = vdwg.mxu0
        %338 = vmatpush.msra.mxu0 0.0
        %339 = vmatpush.msra.mxu0 0.0
        %340 = vmatpush.msra.mxu0 0.0
        %341 = vmatpush.msra.mxu0 0.0
        %342 = vmatpush.msra.mxu0 0.0
        %343 = vmatpush.msra.mxu0 0.0
        %344 = vmatpush.msra.mxu0 0.0
        %345 = vmatpush.msra.mxu0 0.0
        %346 = vmatpush.msra.mxu0 0.0
        %347 = vmatpush.msra.mxu0 0.0
        %348 = vmatpush.msra.mxu0 0.0
        %349 = vmatpush.msra.mxu0 0.0
        %350 = vmatpush.msra.mxu0 0.0
        %351 = vmatpush.msra.mxu0 0.0
        %v352 = vand.u32 %v189, 4294901760
        %353 = vmatpush.msra.mxu0 %v352
        %v354 = vand.u32 %v188, 4294901760
        %355 = vmatpush.msra.mxu0 %v354
        %v356 = vand.u32 %v192, 4294901760
        %v357 = vsub.f32 %v192, %v356
        %v358 = vand.u32 %v357, 4294901760
        %359 = vmatmul.f32.gmra.mxu0 %v358
        %v360 = vpop.f32.mrf.mxu0
        %v361 = vadd.f32 %v321, %v360
        %v362 = vand.u32 %v195, 4294901760
        %v363 = vsub.f32 %v195, %v362
        %v364 = vand.u32 %v363, 4294901760
        %365 = vmatmul.f32.gmra.mxu0 %v364
        %v366 = vpop.f32.mrf.mxu0
        %v367 = vadd.f32 %v326, %v366
        %v368 = vand.u32 %v198, 4294901760
        %v369 = vsub.f32 %v198, %v368
        %v370 = vand.u32 %v369, 4294901760
        %371 = vmatmul.f32.gmra.mxu0 %v370
        %v372 = vpop.f32.mrf.mxu0
        %v373 = vadd.f32 %v331, %v372
        %v374 = vand.u32 %v201, 4294901760
        %v375 = vsub.f32 %v201, %v374
        %v376 = vand.u32 %v375, 4294901760
        %377 = vmatmul.f32.gmra.mxu0 %v376
        %v378 = vpop.f32.mrf.mxu0
        %v379 = vadd.f32 %v336, %v378
        %380 = vdwg.mxu0
        %381 = vmatpush.msra.mxu0 0.0
        %382 = vmatpush.msra.mxu0 0.0
        %383 = vmatpush.msra.mxu0 0.0
        %384 = vmatpush.msra.mxu0 0.0
        %385 = vmatpush.msra.mxu0 0.0
        %386 = vmatpush.msra.mxu0 0.0
        %387 = vmatpush.msra.mxu0 0.0
        %388 = vmatpush.msra.mxu0 0.0
        %389 = vmatpush.msra.mxu0 0.0
        %390 = vmatpush.msra.mxu0 0.0
        %391 = vmatpush.msra.mxu0 0.0
        %392 = vmatpush.msra.mxu0 0.0
        %393 = vmatpush.msra.mxu0 0.0
        %394 = vmatpush.msra.mxu0 0.0
        %v395 = vand.u32 %v189, 4294901760
        %v396 = vsub.f32 %v189, %v395
        %v397 = vand.u32 %v396, 4294901760
        %398 = vmatpush.msra.mxu0 %v397
        %v399 = vand.u32 %v188, 4294901760
        %v400 = vsub.f32 %v188, %v399
        %v401 = vand.u32 %v400, 4294901760
        %402 = vmatpush.msra.mxu0 %v401
        %v403 = vand.u32 %v192, 4294901760
        %404 = vmatmul.f32.gmra.mxu0 %v403
        %v405 = vpop.f32.mrf.mxu0
        %v406 = vadd.f32 %v361, %v405
        %v407 = vand.u32 %v195, 4294901760
        %408 = vmatmul.f32.gmra.mxu0 %v407
        %v409 = vpop.f32.mrf.mxu0
        %v410 = vadd.f32 %v367, %v409
        %v411 = vand.u32 %v198, 4294901760
        %412 = vmatmul.f32.gmra.mxu0 %v411
        %v413 = vpop.f32.mrf.mxu0
        %v414 = vadd.f32 %v373, %v413
        %v415 = vand.u32 %v201, 4294901760
        %416 = vmatmul.f32.gmra.mxu0 %v415
        %v417 = vpop.f32.mrf.mxu0
        %v418 = vadd.f32 %v379, %v417
        %419 = vdwg.mxu0
        %420 = vmatpush.msra.mxu0 0.0
        %421 = vmatpush.msra.mxu0 0.0
        %422 = vmatpush.msra.mxu0 0.0
        %423 = vmatpush.msra.mxu0 0.0
        %424 = vmatpush.msra.mxu0 0.0
        %425 = vmatpush.msra.mxu0 0.0
        %426 = vmatpush.msra.mxu0 0.0
        %427 = vmatpush.msra.mxu0 0.0
        %428 = vmatpush.msra.mxu0 0.0
        %429 = vmatpush.msra.mxu0 0.0
        %430 = vmatpush.msra.mxu0 0.0
        %431 = vmatpush.msra.mxu0 0.0
        %432 = vmatpush.msra.mxu0 0.0
        %433 = vmatpush.msra.mxu0 0.0
        %v434 = vand.u32 %v189, 4294901760
        %435 = vmatpush.msra.mxu0 %v434
        %v436 = vand.u32 %v188, 4294901760
        %437 = vmatpush.msra.mxu0 %v436
        %v438 = vand.u32 %v192, 4294901760
        %439 = vmatmul.f32.gmra.mxu0 %v438
        %v440 = vpop.f32.mrf.mxu0
        %v441 = vadd.f32 %v406, %v440
        %v442 = vand.u32 %v195, 4294901760
        %443 = vmatmul.f32.gmra.mxu0 %v442
        %v444 = vpop.f32.mrf.mxu0
        %v445 = vadd.f32 %v410, %v444
        %v446 = vand.u32 %v198, 4294901760
        %447 = vmatmul.f32.gmra.mxu0 %v446
        %v448 = vpop.f32.mrf.mxu0
        %v449 = vadd.f32 %v414, %v448
        %v450 = vand.u32 %v201, 4294901760
        %451 = vmatmul.f32.gmra.mxu0 %v450
        %v452 = vpop.f32.mrf.mxu0
        %v453 = vadd.f32 %v418, %v452
        %454 = vdwg.mxu0
        %vm455 = vcmask 64512
        %456 = vst.msk [vmem:[%s181] sm:$0xff] %vm455, %v441
        %457 = vst.msk [vmem:[%s181 + $0x20] sm:$0xff] %vm455, %v445
        %458 = vst.msk [vmem:[%s181 + $0x40] sm:$0xff] %vm455, %v449
        %459 = vst.msk [vmem:[%s181 + $0x60] sm:$0xff] %vm455, %v453
        %s460 = scalar_lea.vmem %s0, 16
        %v461 = vld [vmem:[%s460] sm:$0xff]
        %v462 = vld [vmem:[%s460 + $0x8] sm:$0xff]
        %463 = vmatpush.msra.mxu0 0.0
        %464 = vmatpush.msra.mxu0 0.0
        %465 = vmatpush.msra.mxu0 0.0
        %466 = vmatpush.msra.mxu0 0.0
        %467 = vmatpush.msra.mxu0 0.0
        %468 = vmatpush.msra.mxu0 0.0
        %469 = vmatpush.msra.mxu0 0.0
        %470 = vmatpush.msra.mxu0 0.0
        %471 = vmatpush.msra.mxu0 0.0
        %472 = vmatpush.msra.mxu0 0.0
        %473 = vmatpush.msra.mxu0 0.0
        %474 = vmatpush.msra.mxu0 0.0
        %475 = vmatpush.msra.mxu0 0.0
        %476 = vmatpush.msra.mxu0 0.0
        %v477 = vand.u32 %v462, 4294901760
        %478 = vmatpush.msra.mxu0 %v477
        %v479 = vand.u32 %v461, 4294901760
        %480 = vmatpush.msra.mxu0 %v479
        %v481 = vand.u32 %v192, 4294901760
        %v482 = vsub.f32 %v192, %v481
        %v483 = vand.u32 %v482, 4294901760
        %v484 = vsub.f32 %v482, %v483
        %v485 = vand.u32 %v484, 4294901760
        %486 = vmatmul.f32.gmra.mxu0 %v485
        %v487 = vpop.f32.mrf.mxu0
        %v488 = vadd.f32 0.0, %v487
        %v489 = vand.u32 %v195, 4294901760
        %v490 = vsub.f32 %v195, %v489
        %v491 = vand.u32 %v490, 4294901760
        %v492 = vsub.f32 %v490, %v491
        %v493 = vand.u32 %v492, 4294901760
        %494 = vmatmul.f32.gmra.mxu0 %v493
        %v495 = vpop.f32.mrf.mxu0
        %v496 = vadd.f32 0.0, %v495
        %v497 = vand.u32 %v198, 4294901760
        %v498 = vsub.f32 %v198, %v497
        %v499 = vand.u32 %v498, 4294901760
        %v500 = vsub.f32 %v498, %v499
        %v501 = vand.u32 %v500, 4294901760
        %502 = vmatmul.f32.gmra.mxu0 %v501
        %v503 = vpop.f32.mrf.mxu0
        %v504 = vadd.f32 0.0, %v503
        %v505 = vand.u32 %v201, 4294901760
        %v506 = vsub.f32 %v201, %v505
        %v507 = vand.u32 %v506, 4294901760
        %v508 = vsub.f32 %v506, %v507
        %v509 = vand.u32 %v508, 4294901760
        %510 = vmatmul.f32.gmra.mxu0 %v509
        %v511 = vpop.f32.mrf.mxu0
        %v512 = vadd.f32 0.0, %v511
        %513 = vdwg.mxu0
        %514 = vmatpush.msra.mxu0 0.0
        %515 = vmatpush.msra.mxu0 0.0
        %516 = vmatpush.msra.mxu0 0.0
        %517 = vmatpush.msra.mxu0 0.0
        %518 = vmatpush.msra.mxu0 0.0
        %519 = vmatpush.msra.mxu0 0.0
        %520 = vmatpush.msra.mxu0 0.0
        %521 = vmatpush.msra.mxu0 0.0
        %522 = vmatpush.msra.mxu0 0.0
        %523 = vmatpush.msra.mxu0 0.0
        %524 = vmatpush.msra.mxu0 0.0
        %525 = vmatpush.msra.mxu0 0.0
        %526 = vmatpush.msra.mxu0 0.0
        %527 = vmatpush.msra.mxu0 0.0
        %v528 = vand.u32 %v462, 4294901760
        %v529 = vsub.f32 %v462, %v528
        %v530 = vand.u32 %v529, 4294901760
        %v531 = vsub.f32 %v529, %v530
        %v532 = vand.u32 %v531, 4294901760
        %533 = vmatpush.msra.mxu0 %v532
        %v534 = vand.u32 %v461, 4294901760
        %v535 = vsub.f32 %v461, %v534
        %v536 = vand.u32 %v535, 4294901760
        %v537 = vsub.f32 %v535, %v536
        %v538 = vand.u32 %v537, 4294901760
        %539 = vmatpush.msra.mxu0 %v538
        %v540 = vand.u32 %v192, 4294901760
        %541 = vmatmul.f32.gmra.mxu0 %v540
        %v542 = vpop.f32.mrf.mxu0
        %v543 = vadd.f32 %v488, %v542
        %v544 = vand.u32 %v195, 4294901760
        %545 = vmatmul.f32.gmra.mxu0 %v544
        %v546 = vpop.f32.mrf.mxu0
        %v547 = vadd.f32 %v496, %v546
        %v548 = vand.u32 %v198, 4294901760
        %549 = vmatmul.f32.gmra.mxu0 %v548
        %v550 = vpop.f32.mrf.mxu0
        %v551 = vadd.f32 %v504, %v550
        %v552 = vand.u32 %v201, 4294901760
        %553 = vmatmul.f32.gmra.mxu0 %v552
        %v554 = vpop.f32.mrf.mxu0
        %v555 = vadd.f32 %v512, %v554
        %556 = vdwg.mxu0
        %557 = vmatpush.msra.mxu0 0.0
        %558 = vmatpush.msra.mxu0 0.0
        %559 = vmatpush.msra.mxu0 0.0
        %560 = vmatpush.msra.mxu0 0.0
        %561 = vmatpush.msra.mxu0 0.0
        %562 = vmatpush.msra.mxu0 0.0
        %563 = vmatpush.msra.mxu0 0.0
        %564 = vmatpush.msra.mxu0 0.0
        %565 = vmatpush.msra.mxu0 0.0
        %566 = vmatpush.msra.mxu0 0.0
        %567 = vmatpush.msra.mxu0 0.0
        %568 = vmatpush.msra.mxu0 0.0
        %569 = vmatpush.msra.mxu0 0.0
        %570 = vmatpush.msra.mxu0 0.0
        %v571 = vand.u32 %v462, 4294901760
        %v572 = vsub.f32 %v462, %v571
        %573 = vmatpush.msra.mxu0 %v572
        %v574 = vand.u32 %v461, 4294901760
        %v575 = vsub.f32 %v461, %v574
        %576 = vmatpush.msra.mxu0 %v575
        %v577 = vand.u32 %v192, 4294901760
        %v578 = vsub.f32 %v192, %v577
        %579 = vmatmul.f32.gmra.mxu0 %v578
        %v580 = vpop.f32.mrf.mxu0
        %v581 = vadd.f32 %v543, %v580
        %v582 = vand.u32 %v195, 4294901760
        %v583 = vsub.f32 %v195, %v582
        %584 = vmatmul.f32.gmra.mxu0 %v583
        %v585 = vpop.f32.mrf.mxu0
        %v586 = vadd.f32 %v547, %v585
        %v587 = vand.u32 %v198, 4294901760
        %v588 = vsub.f32 %v198, %v587
        %589 = vmatmul.f32.gmra.mxu0 %v588
        %v590 = vpop.f32.mrf.mxu0
        %v591 = vadd.f32 %v551, %v590
        %v592 = vand.u32 %v201, 4294901760
        %v593 = vsub.f32 %v201, %v592
        %594 = vmatmul.f32.gmra.mxu0 %v593
        %v595 = vpop.f32.mrf.mxu0
        %v596 = vadd.f32 %v555, %v595
        %597 = vdwg.mxu0
        %598 = vmatpush.msra.mxu0 0.0
        %599 = vmatpush.msra.mxu0 0.0
        %600 = vmatpush.msra.mxu0 0.0
        %601 = vmatpush.msra.mxu0 0.0
        %602 = vmatpush.msra.mxu0 0.0
        %603 = vmatpush.msra.mxu0 0.0
        %604 = vmatpush.msra.mxu0 0.0
        %605 = vmatpush.msra.mxu0 0.0
        %606 = vmatpush.msra.mxu0 0.0
        %607 = vmatpush.msra.mxu0 0.0
        %608 = vmatpush.msra.mxu0 0.0
        %609 = vmatpush.msra.mxu0 0.0
        %610 = vmatpush.msra.mxu0 0.0
        %611 = vmatpush.msra.mxu0 0.0
        %v612 = vand.u32 %v462, 4294901760
        %613 = vmatpush.msra.mxu0 %v612
        %v614 = vand.u32 %v461, 4294901760
        %615 = vmatpush.msra.mxu0 %v614
        %v616 = vand.u32 %v192, 4294901760
        %v617 = vsub.f32 %v192, %v616
        %v618 = vand.u32 %v617, 4294901760
        %619 = vmatmul.f32.gmra.mxu0 %v618
        %v620 = vpop.f32.mrf.mxu0
        %v621 = vadd.f32 %v581, %v620
        %v622 = vand.u32 %v195, 4294901760
        %v623 = vsub.f32 %v195, %v622
        %v624 = vand.u32 %v623, 4294901760
        %625 = vmatmul.f32.gmra.mxu0 %v624
        %v626 = vpop.f32.mrf.mxu0
        %v627 = vadd.f32 %v586, %v626
        %v628 = vand.u32 %v198, 4294901760
        %v629 = vsub.f32 %v198, %v628
        %v630 = vand.u32 %v629, 4294901760
        %631 = vmatmul.f32.gmra.mxu0 %v630
        %v632 = vpop.f32.mrf.mxu0
        %v633 = vadd.f32 %v591, %v632
        %v634 = vand.u32 %v201, 4294901760
        %v635 = vsub.f32 %v201, %v634
        %v636 = vand.u32 %v635, 4294901760
        %637 = vmatmul.f32.gmra.mxu0 %v636
        %v638 = vpop.f32.mrf.mxu0
        %v639 = vadd.f32 %v596, %v638
        %640 = vdwg.mxu0
        %641 = vmatpush.msra.mxu0 0.0
        %642 = vmatpush.msra.mxu0 0.0
        %643 = vmatpush.msra.mxu0 0.0
        %644 = vmatpush.msra.mxu0 0.0
        %645 = vmatpush.msra.mxu0 0.0
        %646 = vmatpush.msra.mxu0 0.0
        %647 = vmatpush.msra.mxu0 0.0
        %648 = vmatpush.msra.mxu0 0.0
        %649 = vmatpush.msra.mxu0 0.0
        %650 = vmatpush.msra.mxu0 0.0
        %651 = vmatpush.msra.mxu0 0.0
        %652 = vmatpush.msra.mxu0 0.0
        %653 = vmatpush.msra.mxu0 0.0
        %654 = vmatpush.msra.mxu0 0.0
        %v655 = vand.u32 %v462, 4294901760
        %v656 = vsub.f32 %v462, %v655
        %v657 = vand.u32 %v656, 4294901760
        %658 = vmatpush.msra.mxu0 %v657
        %v659 = vand.u32 %v461, 4294901760
        %v660 = vsub.f32 %v461, %v659
        %v661 = vand.u32 %v660, 4294901760
        %662 = vmatpush.msra.mxu0 %v661
        %v663 = vand.u32 %v192, 4294901760
        %664 = vmatmul.f32.gmra.mxu0 %v663
        %v665 = vpop.f32.mrf.mxu0
        %v666 = vadd.f32 %v621, %v665
        %v667 = vand.u32 %v195, 4294901760
        %668 = vmatmul.f32.gmra.mxu0 %v667
        %v669 = vpop.f32.mrf.mxu0
        %v670 = vadd.f32 %v627, %v669
        %v671 = vand.u32 %v198, 4294901760
        %672 = vmatmul.f32.gmra.mxu0 %v671
        %v673 = vpop.f32.mrf.mxu0
        %v674 = vadd.f32 %v633, %v673
        %v675 = vand.u32 %v201, 4294901760
        %676 = vmatmul.f32.gmra.mxu0 %v675
        %v677 = vpop.f32.mrf.mxu0
        %v678 = vadd.f32 %v639, %v677
        %679 = vdwg.mxu0
        %680 = vmatpush.msra.mxu0 0.0
        %681 = vmatpush.msra.mxu0 0.0
        %682 = vmatpush.msra.mxu0 0.0
        %683 = vmatpush.msra.mxu0 0.0
        %684 = vmatpush.msra.mxu0 0.0
        %685 = vmatpush.msra.mxu0 0.0
        %686 = vmatpush.msra.mxu0 0.0
        %687 = vmatpush.msra.mxu0 0.0
        %688 = vmatpush.msra.mxu0 0.0
        %689 = vmatpush.msra.mxu0 0.0
        %690 = vmatpush.msra.mxu0 0.0
        %691 = vmatpush.msra.mxu0 0.0
        %692 = vmatpush.msra.mxu0 0.0
        %693 = vmatpush.msra.mxu0 0.0
        %v694 = vand.u32 %v462, 4294901760
        %695 = vmatpush.msra.mxu0 %v694
        %v696 = vand.u32 %v461, 4294901760
        %697 = vmatpush.msra.mxu0 %v696
        %v698 = vand.u32 %v192, 4294901760
        %699 = vmatmul.f32.gmra.mxu0 %v698
        %v700 = vpop.f32.mrf.mxu0
        %v701 = vadd.f32 %v666, %v700
        %v702 = vand.u32 %v195, 4294901760
        %703 = vmatmul.f32.gmra.mxu0 %v702
        %v704 = vpop.f32.mrf.mxu0
        %v705 = vadd.f32 %v670, %v704
        %v706 = vand.u32 %v198, 4294901760
        %707 = vmatmul.f32.gmra.mxu0 %v706
        %v708 = vpop.f32.mrf.mxu0
        %v709 = vadd.f32 %v674, %v708
        %v710 = vand.u32 %v201, 4294901760
        %711 = vmatmul.f32.gmra.mxu0 %v710
        %v712 = vpop.f32.mrf.mxu0
        %v713 = vadd.f32 %v678, %v712
        %714 = vdwg.mxu0
        %s715 = scalar_lea.vmem %s181, 8 [#allocation5]
        %716 = vst.msk [vmem:[%s715] sm:$0xff] %vm455, %v701
        %717 = vst.msk [vmem:[%s715 + $0x20] sm:$0xff] %vm455, %v705
        %718 = vst.msk [vmem:[%s715 + $0x40] sm:$0xff] %vm455, %v709
        %719 = vst.msk [vmem:[%s715 + $0x60] sm:$0xff] %vm455, %v713
        %v720 = vld [vmem:[%s160] sm:$0xff]
        %v721 = vld [vmem:[%s160 + $0x8] sm:$0xff]
        %v722 = vld [vmem:[%s160 + $0x10] sm:$0xff]
        %v723 = vld [vmem:[%s160 + $0x18] sm:$0xff]
        %v724 = vld [vmem:[%s0] sm:$0xff]
        %v725 = vld [vmem:[%s0 + $0x8] sm:$0xff]
        %730 = vrot.lane.b32.xlu0 %v720, 112
        %v731 = vpop.permute.xlu0 %730
        %732 = vrot.lane.b32.xlu0 %v721, 112
        %v733 = vpop.permute.xlu0 %732
        %734 = vrot.lane.b32.xlu0 %v722, 112
        %v735 = vpop.permute.xlu0 %734
        %736 = vrot.lane.b32.xlu0 %v723, 112
        %v737 = vpop.permute.xlu0 %736
        %v738 = vsel %vm190, %v731, 0
        %v740 = vsel %vm190, %v733, 0
        %v742 = vsel %vm190, %v735, 0
        %v744 = vsel %vm190, %v737, 0
        %746 = vmatpush.msra.mxu0 0.0
        %747 = vmatpush.msra.mxu0 0.0
        %748 = vmatpush.msra.mxu0 0.0
        %749 = vmatpush.msra.mxu0 0.0
        %750 = vmatpush.msra.mxu0 0.0
        %751 = vmatpush.msra.mxu0 0.0
        %752 = vmatpush.msra.mxu0 0.0
        %753 = vmatpush.msra.mxu0 0.0
        %754 = vmatpush.msra.mxu0 0.0
        %755 = vmatpush.msra.mxu0 0.0
        %756 = vmatpush.msra.mxu0 0.0
        %757 = vmatpush.msra.mxu0 0.0
        %758 = vmatpush.msra.mxu0 0.0
        %759 = vmatpush.msra.mxu0 0.0
        %v760 = vand.u32 %v725, 4294901760
        %761 = vmatpush.msra.mxu0 %v760
        %v762 = vand.u32 %v724, 4294901760
        %763 = vmatpush.msra.mxu0 %v762
        %v764 = vand.u32 %v738, 4294901760
        %v765 = vsub.f32 %v738, %v764
        %v766 = vand.u32 %v765, 4294901760
        %v767 = vsub.f32 %v765, %v766
        %v768 = vand.u32 %v767, 4294901760
        %769 = vmatmul.f32.gmra.mxu0 %v768
        %v770 = vpop.f32.mrf.mxu0
        %v771 = vadd.f32 0.0, %v770
        %v772 = vand.u32 %v740, 4294901760
        %v773 = vsub.f32 %v740, %v772
        %v774 = vand.u32 %v773, 4294901760
        %v775 = vsub.f32 %v773, %v774
        %v776 = vand.u32 %v775, 4294901760
        %777 = vmatmul.f32.gmra.mxu0 %v776
        %v778 = vpop.f32.mrf.mxu0
        %v779 = vadd.f32 0.0, %v778
        %v780 = vand.u32 %v742, 4294901760
        %v781 = vsub.f32 %v742, %v780
        %v782 = vand.u32 %v781, 4294901760
        %v783 = vsub.f32 %v781, %v782
        %v784 = vand.u32 %v783, 4294901760
        %785 = vmatmul.f32.gmra.mxu0 %v784
        %v786 = vpop.f32.mrf.mxu0
        %v787 = vadd.f32 0.0, %v786
        %v788 = vand.u32 %v744, 4294901760
        %v789 = vsub.f32 %v744, %v788
        %v790 = vand.u32 %v789, 4294901760
        %v791 = vsub.f32 %v789, %v790
        %v792 = vand.u32 %v791, 4294901760
        %793 = vmatmul.f32.gmra.mxu0 %v792
        %v794 = vpop.f32.mrf.mxu0
        %v795 = vadd.f32 0.0, %v794
        %796 = vdwg.mxu0
        %797 = vmatpush.msra.mxu0 0.0
        %798 = vmatpush.msra.mxu0 0.0
        %799 = vmatpush.msra.mxu0 0.0
        %800 = vmatpush.msra.mxu0 0.0
        %801 = vmatpush.msra.mxu0 0.0
        %802 = vmatpush.msra.mxu0 0.0
        %803 = vmatpush.msra.mxu0 0.0
        %804 = vmatpush.msra.mxu0 0.0
        %805 = vmatpush.msra.mxu0 0.0
        %806 = vmatpush.msra.mxu0 0.0
        %807 = vmatpush.msra.mxu0 0.0
        %808 = vmatpush.msra.mxu0 0.0
        %809 = vmatpush.msra.mxu0 0.0
        %810 = vmatpush.msra.mxu0 0.0
        %v811 = vand.u32 %v725, 4294901760
        %v812 = vsub.f32 %v725, %v811
        %v813 = vand.u32 %v812, 4294901760
        %v814 = vsub.f32 %v812, %v813
        %v815 = vand.u32 %v814, 4294901760
        %816 = vmatpush.msra.mxu0 %v815
        %v817 = vand.u32 %v724, 4294901760
        %v818 = vsub.f32 %v724, %v817
        %v819 = vand.u32 %v818, 4294901760
        %v820 = vsub.f32 %v818, %v819
        %v821 = vand.u32 %v820, 4294901760
        %822 = vmatpush.msra.mxu0 %v821
        %v823 = vand.u32 %v738, 4294901760
        %824 = vmatmul.f32.gmra.mxu0 %v823
        %v825 = vpop.f32.mrf.mxu0
        %v826 = vadd.f32 %v771, %v825
        %v827 = vand.u32 %v740, 4294901760
        %828 = vmatmul.f32.gmra.mxu0 %v827
        %v829 = vpop.f32.mrf.mxu0
        %v830 = vadd.f32 %v779, %v829
        %v831 = vand.u32 %v742, 4294901760
        %832 = vmatmul.f32.gmra.mxu0 %v831
        %v833 = vpop.f32.mrf.mxu0
        %v834 = vadd.f32 %v787, %v833
        %v835 = vand.u32 %v744, 4294901760
        %836 = vmatmul.f32.gmra.mxu0 %v835
        %v837 = vpop.f32.mrf.mxu0
        %v838 = vadd.f32 %v795, %v837
        %839 = vdwg.mxu0
        %840 = vmatpush.msra.mxu0 0.0
        %841 = vmatpush.msra.mxu0 0.0
        %842 = vmatpush.msra.mxu0 0.0
        %843 = vmatpush.msra.mxu0 0.0
        %844 = vmatpush.msra.mxu0 0.0
        %845 = vmatpush.msra.mxu0 0.0
        %846 = vmatpush.msra.mxu0 0.0
        %847 = vmatpush.msra.mxu0 0.0
        %848 = vmatpush.msra.mxu0 0.0
        %849 = vmatpush.msra.mxu0 0.0
        %850 = vmatpush.msra.mxu0 0.0
        %851 = vmatpush.msra.mxu0 0.0
        %852 = vmatpush.msra.mxu0 0.0
        %853 = vmatpush.msra.mxu0 0.0
        %v854 = vand.u32 %v725, 4294901760
        %v855 = vsub.f32 %v725, %v854
        %856 = vmatpush.msra.mxu0 %v855
        %v857 = vand.u32 %v724, 4294901760
        %v858 = vsub.f32 %v724, %v857
        %859 = vmatpush.msra.mxu0 %v858
        %v860 = vand.u32 %v738, 4294901760
        %v861 = vsub.f32 %v738, %v860
        %862 = vmatmul.f32.gmra.mxu0 %v861
        %v863 = vpop.f32.mrf.mxu0
        %v864 = vadd.f32 %v826, %v863
        %v865 = vand.u32 %v740, 4294901760
        %v866 = vsub.f32 %v740, %v865
        %867 = vmatmul.f32.gmra.mxu0 %v866
        %v868 = vpop.f32.mrf.mxu0
        %v869 = vadd.f32 %v830, %v868
        %v870 = vand.u32 %v742, 4294901760
        %v871 = vsub.f32 %v742, %v870
        %872 = vmatmul.f32.gmra.mxu0 %v871
        %v873 = vpop.f32.mrf.mxu0
        %v874 = vadd.f32 %v834, %v873
        %v875 = vand.u32 %v744, 4294901760
        %v876 = vsub.f32 %v744, %v875
        %877 = vmatmul.f32.gmra.mxu0 %v876
        %v878 = vpop.f32.mrf.mxu0
        %v879 = vadd.f32 %v838, %v878
        %880 = vdwg.mxu0
        %881 = vmatpush.msra.mxu0 0.0
        %882 = vmatpush.msra.mxu0 0.0
        %883 = vmatpush.msra.mxu0 0.0
        %884 = vmatpush.msra.mxu0 0.0
        %885 = vmatpush.msra.mxu0 0.0
        %886 = vmatpush.msra.mxu0 0.0
        %887 = vmatpush.msra.mxu0 0.0
        %888 = vmatpush.msra.mxu0 0.0
        %889 = vmatpush.msra.mxu0 0.0
        %890 = vmatpush.msra.mxu0 0.0
        %891 = vmatpush.msra.mxu0 0.0
        %892 = vmatpush.msra.mxu0 0.0
        %893 = vmatpush.msra.mxu0 0.0
        %894 = vmatpush.msra.mxu0 0.0
        %v895 = vand.u32 %v725, 4294901760
        %896 = vmatpush.msra.mxu0 %v895
        %v897 = vand.u32 %v724, 4294901760
        %898 = vmatpush.msra.mxu0 %v897
        %v899 = vand.u32 %v738, 4294901760
        %v900 = vsub.f32 %v738, %v899
        %v901 = vand.u32 %v900, 4294901760
        %902 = vmatmul.f32.gmra.mxu0 %v901
        %v903 = vpop.f32.mrf.mxu0
        %v904 = vadd.f32 %v864, %v903
        %v905 = vand.u32 %v740, 4294901760
        %v906 = vsub.f32 %v740, %v905
        %v907 = vand.u32 %v906, 4294901760
        %908 = vmatmul.f32.gmra.mxu0 %v907
        %v909 = vpop.f32.mrf.mxu0
        %v910 = vadd.f32 %v869, %v909
        %v911 = vand.u32 %v742, 4294901760
        %v912 = vsub.f32 %v742, %v911
        %v913 = vand.u32 %v912, 4294901760
        %914 = vmatmul.f32.gmra.mxu0 %v913
        %v915 = vpop.f32.mrf.mxu0
        %v916 = vadd.f32 %v874, %v915
        %v917 = vand.u32 %v744, 4294901760
        %v918 = vsub.f32 %v744, %v917
        %v919 = vand.u32 %v918, 4294901760
        %920 = vmatmul.f32.gmra.mxu0 %v919
        %v921 = vpop.f32.mrf.mxu0
        %v922 = vadd.f32 %v879, %v921
        %923 = vdwg.mxu0
        %924 = vmatpush.msra.mxu0 0.0
        %925 = vmatpush.msra.mxu0 0.0
        %926 = vmatpush.msra.mxu0 0.0
        %927 = vmatpush.msra.mxu0 0.0
        %928 = vmatpush.msra.mxu0 0.0
        %929 = vmatpush.msra.mxu0 0.0
        %930 = vmatpush.msra.mxu0 0.0
        %931 = vmatpush.msra.mxu0 0.0
        %932 = vmatpush.msra.mxu0 0.0
        %933 = vmatpush.msra.mxu0 0.0
        %934 = vmatpush.msra.mxu0 0.0
        %935 = vmatpush.msra.mxu0 0.0
        %936 = vmatpush.msra.mxu0 0.0
        %937 = vmatpush.msra.mxu0 0.0
        %v938 = vand.u32 %v725, 4294901760
        %v939 = vsub.f32 %v725, %v938
        %v940 = vand.u32 %v939, 4294901760
        %941 = vmatpush.msra.mxu0 %v940
        %v942 = vand.u32 %v724, 4294901760
        %v943 = vsub.f32 %v724, %v942
        %v944 = vand.u32 %v943, 4294901760
        %945 = vmatpush.msra.mxu0 %v944
        %v946 = vand.u32 %v738, 4294901760
        %947 = vmatmul.f32.gmra.mxu0 %v946
        %v948 = vpop.f32.mrf.mxu0
        %v949 = vadd.f32 %v904, %v948
        %v950 = vand.u32 %v740, 4294901760
        %951 = vmatmul.f32.gmra.mxu0 %v950
        %v952 = vpop.f32.mrf.mxu0
        %v953 = vadd.f32 %v910, %v952
        %v954 = vand.u32 %v742, 4294901760
        %955 = vmatmul.f32.gmra.mxu0 %v954
        %v956 = vpop.f32.mrf.mxu0
        %v957 = vadd.f32 %v916, %v956
        %v958 = vand.u32 %v744, 4294901760
        %959 = vmatmul.f32.gmra.mxu0 %v958
        %v960 = vpop.f32.mrf.mxu0
        %v961 = vadd.f32 %v922, %v960
        %962 = vdwg.mxu0
        %963 = vmatpush.msra.mxu0 0.0
        %964 = vmatpush.msra.mxu0 0.0
        %965 = vmatpush.msra.mxu0 0.0
        %966 = vmatpush.msra.mxu0 0.0
        %967 = vmatpush.msra.mxu0 0.0
        %968 = vmatpush.msra.mxu0 0.0
        %969 = vmatpush.msra.mxu0 0.0
        %970 = vmatpush.msra.mxu0 0.0
        %971 = vmatpush.msra.mxu0 0.0
        %972 = vmatpush.msra.mxu0 0.0
        %973 = vmatpush.msra.mxu0 0.0
        %974 = vmatpush.msra.mxu0 0.0
        %975 = vmatpush.msra.mxu0 0.0
        %976 = vmatpush.msra.mxu0 0.0
        %v977 = vand.u32 %v725, 4294901760
        %978 = vmatpush.msra.mxu0 %v977
        %v979 = vand.u32 %v724, 4294901760
        %980 = vmatpush.msra.mxu0 %v979
        %v981 = vand.u32 %v738, 4294901760
        %982 = vmatmul.f32.gmra.mxu0 %v981
        %v983 = vpop.f32.mrf.mxu0
        %v984 = vadd.f32 %v949, %v983
        %v985 = vand.u32 %v740, 4294901760
        %986 = vmatmul.f32.gmra.mxu0 %v985
        %v987 = vpop.f32.mrf.mxu0
        %v988 = vadd.f32 %v953, %v987
        %v989 = vand.u32 %v742, 4294901760
        %990 = vmatmul.f32.gmra.mxu0 %v989
        %v991 = vpop.f32.mrf.mxu0
        %v992 = vadd.f32 %v957, %v991
        %v993 = vand.u32 %v744, 4294901760
        %994 = vmatmul.f32.gmra.mxu0 %v993
        %v995 = vpop.f32.mrf.mxu0
        %v996 = vadd.f32 %v961, %v995
        %997 = vdwg.mxu0
        %s998 = scalar_lea.vmem %s181, 16 [#allocation5]
        %999 = vst.msk [vmem:[%s998] sm:$0xff] %vm455, %v984
        %1000 = vst.msk [vmem:[%s998 + $0x20] sm:$0xff] %vm455, %v988
        %1001 = vst.msk [vmem:[%s998 + $0x40] sm:$0xff] %vm455, %v992
        %1002 = vst.msk [vmem:[%s998 + $0x60] sm:$0xff] %vm455, %v996
        %v1003 = vld [vmem:[%s460] sm:$0xff]
        %v1004 = vld [vmem:[%s460 + $0x8] sm:$0xff]
        %1005 = vmatpush.msra.mxu0 0.0
        %1006 = vmatpush.msra.mxu0 0.0
        %1007 = vmatpush.msra.mxu0 0.0
        %1008 = vmatpush.msra.mxu0 0.0
        %1009 = vmatpush.msra.mxu0 0.0
        %1010 = vmatpush.msra.mxu0 0.0
        %1011 = vmatpush.msra.mxu0 0.0
        %1012 = vmatpush.msra.mxu0 0.0
        %1013 = vmatpush.msra.mxu0 0.0
        %1014 = vmatpush.msra.mxu0 0.0
        %1015 = vmatpush.msra.mxu0 0.0
        %1016 = vmatpush.msra.mxu0 0.0
        %1017 = vmatpush.msra.mxu0 0.0
        %1018 = vmatpush.msra.mxu0 0.0
        %v1019 = vand.u32 %v1004, 4294901760
        %1020 = vmatpush.msra.mxu0 %v1019
        %v1021 = vand.u32 %v1003, 4294901760
        %1022 = vmatpush.msra.mxu0 %v1021
        %v1023 = vand.u32 %v738, 4294901760
        %v1024 = vsub.f32 %v738, %v1023
        %v1025 = vand.u32 %v1024, 4294901760
        %v1026 = vsub.f32 %v1024, %v1025
        %v1027 = vand.u32 %v1026, 4294901760
        %1028 = vmatmul.f32.gmra.mxu0 %v1027
        %v1029 = vpop.f32.mrf.mxu0
        %v1030 = vadd.f32 0.0, %v1029
        %v1031 = vand.u32 %v740, 4294901760
        %v1032 = vsub.f32 %v740, %v1031
        %v1033 = vand.u32 %v1032, 4294901760
        %v1034 = vsub.f32 %v1032, %v1033
        %v1035 = vand.u32 %v1034, 4294901760
        %1036 = vmatmul.f32.gmra.mxu0 %v1035
        %v1037 = vpop.f32.mrf.mxu0
        %v1038 = vadd.f32 0.0, %v1037
        %v1039 = vand.u32 %v742, 4294901760
        %v1040 = vsub.f32 %v742, %v1039
        %v1041 = vand.u32 %v1040, 4294901760
        %v1042 = vsub.f32 %v1040, %v1041
        %v1043 = vand.u32 %v1042, 4294901760
        %1044 = vmatmul.f32.gmra.mxu0 %v1043
        %v1045 = vpop.f32.mrf.mxu0
        %v1046 = vadd.f32 0.0, %v1045
        %v1047 = vand.u32 %v744, 4294901760
        %v1048 = vsub.f32 %v744, %v1047
        %v1049 = vand.u32 %v1048, 4294901760
        %v1050 = vsub.f32 %v1048, %v1049
        %v1051 = vand.u32 %v1050, 4294901760
        %1052 = vmatmul.f32.gmra.mxu0 %v1051
        %v1053 = vpop.f32.mrf.mxu0
        %v1054 = vadd.f32 0.0, %v1053
        %1055 = vdwg.mxu0
        %1056 = vmatpush.msra.mxu0 0.0
        %1057 = vmatpush.msra.mxu0 0.0
        %1058 = vmatpush.msra.mxu0 0.0
        %1059 = vmatpush.msra.mxu0 0.0
        %1060 = vmatpush.msra.mxu0 0.0
        %1061 = vmatpush.msra.mxu0 0.0
        %1062 = vmatpush.msra.mxu0 0.0
        %1063 = vmatpush.msra.mxu0 0.0
        %1064 = vmatpush.msra.mxu0 0.0
        %1065 = vmatpush.msra.mxu0 0.0
        %1066 = vmatpush.msra.mxu0 0.0
        %1067 = vmatpush.msra.mxu0 0.0
        %1068 = vmatpush.msra.mxu0 0.0
        %1069 = vmatpush.msra.mxu0 0.0
        %v1070 = vand.u32 %v1004, 4294901760
        %v1071 = vsub.f32 %v1004, %v1070
        %v1072 = vand.u32 %v1071, 4294901760
        %v1073 = vsub.f32 %v1071, %v1072
        %v1074 = vand.u32 %v1073, 4294901760
        %1075 = vmatpush.msra.mxu0 %v1074
        %v1076 = vand.u32 %v1003, 4294901760
        %v1077 = vsub.f32 %v1003, %v1076
        %v1078 = vand.u32 %v1077, 4294901760
        %v1079 = vsub.f32 %v1077, %v1078
        %v1080 = vand.u32 %v1079, 4294901760
        %1081 = vmatpush.msra.mxu0 %v1080
        %v1082 = vand.u32 %v738, 4294901760
        %1083 = vmatmul.f32.gmra.mxu0 %v1082
        %v1084 = vpop.f32.mrf.mxu0
        %v1085 = vadd.f32 %v1030, %v1084
        %v1086 = vand.u32 %v740, 4294901760
        %1087 = vmatmul.f32.gmra.mxu0 %v1086
        %v1088 = vpop.f32.mrf.mxu0
        %v1089 = vadd.f32 %v1038, %v1088
        %v1090 = vand.u32 %v742, 4294901760
        %1091 = vmatmul.f32.gmra.mxu0 %v1090
        %v1092 = vpop.f32.mrf.mxu0
        %v1093 = vadd.f32 %v1046, %v1092
        %v1094 = vand.u32 %v744, 4294901760
        %1095 = vmatmul.f32.gmra.mxu0 %v1094
        %v1096 = vpop.f32.mrf.mxu0
        %v1097 = vadd.f32 %v1054, %v1096
        %1098 = vdwg.mxu0
        %1099 = vmatpush.msra.mxu0 0.0
        %1100 = vmatpush.msra.mxu0 0.0
        %1101 = vmatpush.msra.mxu0 0.0
        %1102 = vmatpush.msra.mxu0 0.0
        %1103 = vmatpush.msra.mxu0 0.0
        %1104 = vmatpush.msra.mxu0 0.0
        %1105 = vmatpush.msra.mxu0 0.0
        %1106 = vmatpush.msra.mxu0 0.0
        %1107 = vmatpush.msra.mxu0 0.0
        %1108 = vmatpush.msra.mxu0 0.0
        %1109 = vmatpush.msra.mxu0 0.0
        %1110 = vmatpush.msra.mxu0 0.0
        %1111 = vmatpush.msra.mxu0 0.0
        %1112 = vmatpush.msra.mxu0 0.0
        %v1113 = vand.u32 %v1004, 4294901760
        %v1114 = vsub.f32 %v1004, %v1113
        %1115 = vmatpush.msra.mxu0 %v1114
        %v1116 = vand.u32 %v1003, 4294901760
        %v1117 = vsub.f32 %v1003, %v1116
        %1118 = vmatpush.msra.mxu0 %v1117
        %v1119 = vand.u32 %v738, 4294901760
        %v1120 = vsub.f32 %v738, %v1119
        %1121 = vmatmul.f32.gmra.mxu0 %v1120
        %v1122 = vpop.f32.mrf.mxu0
        %v1123 = vadd.f32 %v1085, %v1122
        %v1124 = vand.u32 %v740, 4294901760
        %v1125 = vsub.f32 %v740, %v1124
        %1126 = vmatmul.f32.gmra.mxu0 %v1125
        %v1127 = vpop.f32.mrf.mxu0
        %v1128 = vadd.f32 %v1089, %v1127
        %v1129 = vand.u32 %v742, 4294901760
        %v1130 = vsub.f32 %v742, %v1129
        %1131 = vmatmul.f32.gmra.mxu0 %v1130
        %v1132 = vpop.f32.mrf.mxu0
        %v1133 = vadd.f32 %v1093, %v1132
        %v1134 = vand.u32 %v744, 4294901760
        %v1135 = vsub.f32 %v744, %v1134
        %1136 = vmatmul.f32.gmra.mxu0 %v1135
        %v1137 = vpop.f32.mrf.mxu0
        %v1138 = vadd.f32 %v1097, %v1137
        %1139 = vdwg.mxu0
        %1140 = vmatpush.msra.mxu0 0.0
        %1141 = vmatpush.msra.mxu0 0.0
        %1142 = vmatpush.msra.mxu0 0.0
        %1143 = vmatpush.msra.mxu0 0.0
        %1144 = vmatpush.msra.mxu0 0.0
        %1145 = vmatpush.msra.mxu0 0.0
        %1146 = vmatpush.msra.mxu0 0.0
        %1147 = vmatpush.msra.mxu0 0.0
        %1148 = vmatpush.msra.mxu0 0.0
        %1149 = vmatpush.msra.mxu0 0.0
        %1150 = vmatpush.msra.mxu0 0.0
        %1151 = vmatpush.msra.mxu0 0.0
        %1152 = vmatpush.msra.mxu0 0.0
        %1153 = vmatpush.msra.mxu0 0.0
        %v1154 = vand.u32 %v1004, 4294901760
        %1155 = vmatpush.msra.mxu0 %v1154
        %v1156 = vand.u32 %v1003, 4294901760
        %1157 = vmatpush.msra.mxu0 %v1156
        %v1158 = vand.u32 %v738, 4294901760
        %v1159 = vsub.f32 %v738, %v1158
        %v1160 = vand.u32 %v1159, 4294901760
        %1161 = vmatmul.f32.gmra.mxu0 %v1160
        %v1162 = vpop.f32.mrf.mxu0
        %v1163 = vadd.f32 %v1123, %v1162
        %v1164 = vand.u32 %v740, 4294901760
        %v1165 = vsub.f32 %v740, %v1164
        %v1166 = vand.u32 %v1165, 4294901760
        %1167 = vmatmul.f32.gmra.mxu0 %v1166
        %v1168 = vpop.f32.mrf.mxu0
        %v1169 = vadd.f32 %v1128, %v1168
        %v1170 = vand.u32 %v742, 4294901760
        %v1171 = vsub.f32 %v742, %v1170
        %v1172 = vand.u32 %v1171, 4294901760
        %1173 = vmatmul.f32.gmra.mxu0 %v1172
        %v1174 = vpop.f32.mrf.mxu0
        %v1175 = vadd.f32 %v1133, %v1174
        %v1176 = vand.u32 %v744, 4294901760
        %v1177 = vsub.f32 %v744, %v1176
        %v1178 = vand.u32 %v1177, 4294901760
        %1179 = vmatmul.f32.gmra.mxu0 %v1178
        %v1180 = vpop.f32.mrf.mxu0
        %v1181 = vadd.f32 %v1138, %v1180
        %1182 = vdwg.mxu0
        %1183 = vmatpush.msra.mxu0 0.0
        %1184 = vmatpush.msra.mxu0 0.0
        %1185 = vmatpush.msra.mxu0 0.0
        %1186 = vmatpush.msra.mxu0 0.0
        %1187 = vmatpush.msra.mxu0 0.0
        %1188 = vmatpush.msra.mxu0 0.0
        %1189 = vmatpush.msra.mxu0 0.0
        %1190 = vmatpush.msra.mxu0 0.0
        %1191 = vmatpush.msra.mxu0 0.0
        %1192 = vmatpush.msra.mxu0 0.0
        %1193 = vmatpush.msra.mxu0 0.0
        %1194 = vmatpush.msra.mxu0 0.0
        %1195 = vmatpush.msra.mxu0 0.0
        %1196 = vmatpush.msra.mxu0 0.0
        %v1197 = vand.u32 %v1004, 4294901760
        %v1198 = vsub.f32 %v1004, %v1197
        %v1199 = vand.u32 %v1198, 4294901760
        %1200 = vmatpush.msra.mxu0 %v1199
        %v1201 = vand.u32 %v1003, 4294901760
        %v1202 = vsub.f32 %v1003, %v1201
        %v1203 = vand.u32 %v1202, 4294901760
        %1204 = vmatpush.msra.mxu0 %v1203
        %v1205 = vand.u32 %v738, 4294901760
        %1206 = vmatmul.f32.gmra.mxu0 %v1205
        %v1207 = vpop.f32.mrf.mxu0
        %v1208 = vadd.f32 %v1163, %v1207
        %v1209 = vand.u32 %v740, 4294901760
        %1210 = vmatmul.f32.gmra.mxu0 %v1209
        %v1211 = vpop.f32.mrf.mxu0
        %v1212 = vadd.f32 %v1169, %v1211
        %v1213 = vand.u32 %v742, 4294901760
        %1214 = vmatmul.f32.gmra.mxu0 %v1213
        %v1215 = vpop.f32.mrf.mxu0
        %v1216 = vadd.f32 %v1175, %v1215
        %v1217 = vand.u32 %v744, 4294901760
        %1218 = vmatmul.f32.gmra.mxu0 %v1217
        %v1219 = vpop.f32.mrf.mxu0
        %v1220 = vadd.f32 %v1181, %v1219
        %1221 = vdwg.mxu0
        %1222 = vmatpush.msra.mxu0 0.0
        %1223 = vmatpush.msra.mxu0 0.0
        %1224 = vmatpush.msra.mxu0 0.0
        %1225 = vmatpush.msra.mxu0 0.0
        %1226 = vmatpush.msra.mxu0 0.0
        %1227 = vmatpush.msra.mxu0 0.0
        %1228 = vmatpush.msra.mxu0 0.0
        %1229 = vmatpush.msra.mxu0 0.0
        %1230 = vmatpush.msra.mxu0 0.0
        %1231 = vmatpush.msra.mxu0 0.0
        %1232 = vmatpush.msra.mxu0 0.0
        %1233 = vmatpush.msra.mxu0 0.0
        %1234 = vmatpush.msra.mxu0 0.0
        %1235 = vmatpush.msra.mxu0 0.0
        %v1236 = vand.u32 %v1004, 4294901760
        %1237 = vmatpush.msra.mxu0 %v1236
        %v1238 = vand.u32 %v1003, 4294901760
        %1239 = vmatpush.msra.mxu0 %v1238
        %v1240 = vand.u32 %v738, 4294901760
        %1241 = vmatmul.f32.gmra.mxu0 %v1240
        %v1242 = vpop.f32.mrf.mxu0
        %v1243 = vadd.f32 %v1208, %v1242
        %v1244 = vand.u32 %v740, 4294901760
        %1245 = vmatmul.f32.gmra.mxu0 %v1244
        %v1246 = vpop.f32.mrf.mxu0
        %v1247 = vadd.f32 %v1212, %v1246
        %v1248 = vand.u32 %v742, 4294901760
        %1249 = vmatmul.f32.gmra.mxu0 %v1248
        %v1250 = vpop.f32.mrf.mxu0
        %v1251 = vadd.f32 %v1216, %v1250
        %v1252 = vand.u32 %v744, 4294901760
        %1253 = vmatmul.f32.gmra.mxu0 %v1252
        %v1254 = vpop.f32.mrf.mxu0
        %v1255 = vadd.f32 %v1220, %v1254
        %1256 = vdwg.mxu0
        %s1257 = scalar_lea.vmem %s181, 24 [#allocation5]
        %1258 = vst.msk [vmem:[%s1257] sm:$0xff] %vm455, %v1243
        %1259 = vst.msk [vmem:[%s1257 + $0x20] sm:$0xff] %vm455, %v1247
        %1260 = vst.msk [vmem:[%s1257 + $0x40] sm:$0xff] %vm455, %v1251
        %1261 = vst.msk [vmem:[%s1257 + $0x60] sm:$0xff] %vm455, %v1255
        %s1262 = sand.u32 %s90, 1
        %s1263 = scalar_lea.sflag [#allocation4], %s1262
        %s1264 = sand.u32 %s90, 1
        %s1265 = smul.addr %s1264, 128
        %s1266 = scalar_lea.vmem [#allocation5], %s1265
        // Predicated region
        $region33: #{tpu_custom_call.1} parent=27 // pred_check
          %p1267 = pneg %p100
        $region34: #{tpu_custom_call.1} parent=27 // pred_check_branch
          %1269 = sbr.rel (%p1267) target = $region36
        $region35: #{tpu_custom_call.1} parent=27 // pred_region
          %s1270 = smul.u32 4, %s24
          %1272 = vsyncadd %s1263, 0
          %s1273 = smul.addr %s1270, 4
          %s1274 = smul.addr %s23, 16
          %s1275 = sadd.s32 %s1273, %s1274
          %s1276 = smul.addr %s1275, 8
          %s1277 = scalar_lea.hbm %s2, %s1276
          %s1278 = sshll.u32 %s1266, 4
          %s1279 = int_to_ptr.vmem [resolvable:$true] %s1278
          %s1280 = sshll.u32 %s1277, 4
          %s1281 = int_to_ptr.hbm [resolvable:$true] %s1280
          %1286 = dma.vmem_to_hbm [thread:$0]  %s1279, 2048, %s1281, %s1263, 128, 128, 8
        $region36: #{tpu_custom_call.1} parent=27 // pred_fallthru
          _
      $region28: #{tpu_custom_call.1} parent=5 // pred_fallthru
        _
      %p1287 = scmp.le.s32.totalorder 2, %s14
      // Predicated region
      $region37: #{tpu_custom_call.1} parent=5 // pred_check
        %p1288 = pneg %p1287
      $region38: #{tpu_custom_call.1} parent=5 // pred_check_branch
        %1290 = sbr.rel (%p1288) target = $region40
      $region39: #{tpu_custom_call.1} parent=5 // pred_region
        %s1291 = ssub.s32 %s14, 2
        // Predicated region
        $region41: #{tpu_custom_call.1} parent=39 // pred_check
          %p1292 = pneg %p106
        $region42: #{tpu_custom_call.1} parent=39 // pred_check_branch
          %1294 = sbr.rel (%p1292) target = $region44
        $region43: #{tpu_custom_call.1} parent=39 // pred_region
          %s1295 = sand.u32 %s91, 1
          %s1296 = scalar_lea.sflag [#allocation4], %s1295
          %s1297 = sand.u32 %s91, 1
          %s1298 = smul.addr %s1297, 128
          %s1299 = scalar_lea.vmem [#allocation5], %s1298
          %1301 = dma.done %s1296, 2048
        $region44: #{tpu_custom_call.1} parent=39 // pred_fallthru
          _
      $region40: #{tpu_custom_call.1} parent=5 // pred_fallthru
        _
    $region6: #{tpu_custom_call.1} parent=1 // loop_footer
      %s18 = sadd.s32 1, %s14
    $region7: #{tpu_custom_call.1} parent=1 // loop_footer_branch
      %13 = sbr.rel target = $region3
    $region8: #{tpu_custom_call.1} parent=1 // loop_exit
      _
    %1302 = vsyncpa [#allocation3], 1
    %s1303 = scalar_lea.sflag [#allocation3], 1
    %1304 = vsyncpa %s1303, 1
    %1305 = vsyncpa [#allocation4], 1
    %s1306 = scalar_lea.sflag [#allocation4], 1
    %1307 = vsyncpa %s1306, 1

</llo_original>
